<compile_context>
chip_gen: v5e
topology: v5e:2x2
jax: 0.10.0
libtpu: 0.0.40
codegen_flags: <defaults>
</compile_context>

<pallas_src>
import jax
import jax.numpy as jnp
from jax.experimental import pallas as pl
from jax.experimental.pallas import tpu as pltpu

_LANE = 128


def _tpu_config():
    """Return (vmem_capacity_bytes, multi_tensorcore) with safe fallbacks."""
    vmem_bytes = 128 << 20          # v5e/v6e default
    multi_tc = False
    try:
        info = pltpu.get_tpu_info()
        vmem_bytes = int(getattr(info, "vmem_capacity_bytes", vmem_bytes))
    except Exception:
        pass
    try:
        kind = jax.devices()[0].device_kind.lower()
        if "7" in kind:             # TPU v7x: 2 TensorCores per chip
            multi_tc = True
    except Exception:
        pass
    if vmem_bytes <= (64 << 20):    # 64 MiB VMEM per core => v7x-class
        multi_tc = True
    return vmem_bytes, multi_tc


def _erf(x):
    # Abramowitz & Stegun 7.1.26 rational-exp erf (|err| < 1.5e-7).
    # exp -> EUP slot; divide -> EUP approx reciprocal + 1 Newton step
    # (rel err ~1e-8, 2 VALU ops instead of a full f32 divide sequence);
    # sign(x)*y -> single compare/select.
    p = 0.3275911
    a1, a2, a3, a4, a5 = (0.254829592, -0.284496736, 1.421413741,
                          -1.453152027, 1.061405429)
    ax = jnp.abs(x)
    d = 1.0 + p * ax
    r = pl.reciprocal(d, approx=True)
    t = r * (2.0 - d * r)                                   # Newton refine
    poly = t * (a1 + t * (a2 + t * (a3 + t * (a4 + t * a5))))
    y = 1.0 - poly * jnp.exp(-(ax * ax))
    return jnp.where(x >= 0.0, y, -y)


def _gelu(x):
    # nn.GELU() default = exact erf formulation.
    return 0.5 * x * (1.0 + _erf(x * 0.7071067811865476))


def _mlp_kernel(x_ref, w1_ref, b1_ref, w2_ref, b2_ref, w3_ref, b3_ref, o_ref):
    # All refs are (feature, tile_b): batch = lanes, features = sublanes.
    x = x_ref[...]                                          # (in_dim, tb)
    if x_ref.shape[0] == 1:
        # K=1 "matmul" is a degenerate outer product: keep it on the VPU.
        h1 = w1_ref[...] * x + b1_ref[...]                  # (16,1)*(1,tb)
    else:
        h1 = jnp.dot(w1_ref[...], x,
                     preferred_element_type=jnp.float32) + b1_ref[...]
    h1 = _gelu(h1)                                          # (16, tb)
    h2 = jnp.dot(w2_ref[...], h1,
                 preferred_element_type=jnp.float32) + b2_ref[...]
    h2 = _gelu(h2)                                          # (16, tb)
    h3 = jnp.dot(w3_ref[...], h2,
                 preferred_element_type=jnp.float32) + b3_ref[...]
    o_ref[...] = h3.astype(o_ref.dtype)                     # lane-dense store


def seasonal_pattern_forward(x, params, *, tile_b=32768):
    """x: (B,) or (B, input_dim) float32 -> (B, output_dim). Call under jit."""
    if x.ndim == 1:
        x = x[:, None]
    B, input_dim = x.shape
    w1, b1, w2, b2, w3, b3 = params          # PyTorch layout: W is (out, in)
    hidden = w1.shape[0]
    output_dim = w3.shape[0]

    vmem_bytes, multi_tc = _tpu_config()
    # Scoped VMEM budget: generous on 128 MiB parts, capped on v7x (64 MiB).
    vmem_limit = (64 << 20) if vmem_bytes >= (96 << 20) else (48 << 20)

    # --- batch tiling: batch rides the lane axis ---------------------------
    b_lanes = pl.cdiv(B, _LANE) * _LANE
    # ~256 B of live VMEM per batch lane (double-buffered IO + f32 (16,tb)
    # intermediates) -> VMEM-derived cap, plus a hard 128K-lane cap for v7x.
    tb_vmem_cap = max((vmem_limit // 256) // _LANE * _LANE, _LANE)
    tile_b = max(tile_b // _LANE, 1) * _LANE
    tile_b = min(tile_b, 131072, tb_vmem_cap, b_lanes)
    grid_b = pl.cdiv(b_lanes, tile_b)

    # On multi-TensorCore chips (v7x) prefer an even number of grid steps so
    # the "parallel" megacore split is balanced; no-op on v5e/v6e.
    if multi_tc and grid_b < 8 and (grid_b % 2 == 1) and b_lanes >= 2 * _LANE:
        cand = pl.cdiv(pl.cdiv(b_lanes, grid_b + 1), _LANE) * _LANE
        if cand >= _LANE and pl.cdiv(b_lanes, cand) % 2 == 0:
            tile_b = cand
            grid_b = pl.cdiv(b_lanes, tile_b)

    # (B, in) -> (in, B): layout plumbing only (no pad; Pallas masks the
    # ragged last block). For input_dim == 1 this is just a reshape.
    xt = x.T
    # Biases as (N, 1) columns so they broadcast across the lane/batch axis.
    b1c = b1.reshape(hidden, 1)
    b2c = b2.reshape(hidden, 1)
    b3c = b3.reshape(output_dim, 1)

    out_t = pl.pallas_call(
        _mlp_kernel,
        out_shape=jax.ShapeDtypeStruct((output_dim, B), x.dtype),
        grid_spec=pl.GridSpec(
            grid=(grid_b,),
            in_specs=[
                pl.BlockSpec((input_dim, tile_b), lambda i: (0, i)),
                # Weights/biases: constant index_map keeps them VMEM-resident.
                pl.BlockSpec((hidden, input_dim), lambda i: (0, 0)),   # w1
                pl.BlockSpec((hidden, 1), lambda i: (0, 0)),           # b1
                pl.BlockSpec((hidden, hidden), lambda i: (0, 0)),      # w2
                pl.BlockSpec((hidden, 1), lambda i: (0, 0)),           # b2
                pl.BlockSpec((output_dim, hidden), lambda i: (0, 0)),  # w3
                pl.BlockSpec((output_dim, 1), lambda i: (0, 0)),       # b3
            ],
            out_specs=pl.BlockSpec((output_dim, tile_b), lambda i: (0, i)),
        ),
        compiler_params=pltpu.CompilerParams(
            dimension_semantics=("parallel",),
            vmem_limit_bytes=vmem_limit),
    )(xt, w1, b1c, w2, b2c, w3, b3c)

    return out_t.T                                           # (B, output_dim)


def init_params(key, input_dim=1, hidden=16, output_dim=4, dtype=jnp.float32):
    """Deterministic synthetic params. Weights stored PyTorch-style (out, in)."""
    ks = jax.random.split(key, 6)
    w1 = jax.random.normal(ks[0], (hidden, input_dim), dtype) * 0.1
    b1 = jax.random.normal(ks[1], (hidden,), dtype) * 0.01
    w2 = jax.random.normal(ks[2], (hidden, hidden), dtype) * 0.1
    b2 = jax.random.normal(ks[3], (hidden,), dtype) * 0.01
    w3 = jax.random.normal(ks[4], (output_dim, hidden), dtype) * 0.1
    b3 = jax.random.normal(ks[5], (output_dim,), dtype) * 0.01
    return (w1, b1, w2, b2, w3, b3)


def reference_forward(x, params):
    """Plain-JAX reference matching the PyTorch forward (exact-erf GELU)."""
    if x.ndim == 1:
        x = x[:, None]
    w1, b1, w2, b2, w3, b3 = params
    h = jax.nn.gelu(x @ w1.T + b1, approximate=False)
    h = jax.nn.gelu(h @ w2.T + b2, approximate=False)
    return h @ w3.T + b3


if __name__ == "__main__":
    key = jax.random.PRNGKey(0)
    k_params, k_x1, k_x2 = jax.random.split(key, 3)

    params = init_params(k_params, input_dim=1, hidden=16, output_dim=4)
    fwd = jax.jit(seasonal_pattern_forward)

    # Day-of-year-like scalar inputs, shape (batch,). Both batches are
    # non-multiples of 128 to exercise the masked ragged-tail handling.
    for kx, batch in ((k_x1, 8), (k_x2, 200)):
        x = jax.random.uniform(kx, (batch,), jnp.float32,
                               minval=0.0, maxval=365.0)
        out = jax.block_until_ready(fwd(x, params))
        ref = reference_forward(x, params)
        assert out.shape == (batch, 4), out.shape
        max_err = jnp.max(jnp.abs(out - ref))
        assert jnp.allclose(out, ref, atol=2e-4, rtol=2e-4), \
            f"batch={batch} max abs err {max_err}"

    print("KERNEL_OK")
</pallas_src>

<mosaic_0001>
module attributes {stable_mosaic.version = 11 : i64} {
  func.func @_mlp_kernel(%arg0: i32, %arg1: memref<1x128xf32, #tpu.memory_space<vmem>>, %arg2: memref<16x1xf32, #tpu.memory_space<vmem>>, %arg3: memref<16x1xf32, #tpu.memory_space<vmem>>, %arg4: memref<16x16xf32, #tpu.memory_space<vmem>>, %arg5: memref<16x1xf32, #tpu.memory_space<vmem>>, %arg6: memref<4x16xf32, #tpu.memory_space<vmem>>, %arg7: memref<4x1xf32, #tpu.memory_space<vmem>>, %arg8: memref<4x128xf32, #tpu.memory_space<vmem>>) attributes {dimension_semantics = [#tpu.dimension_semantics<parallel>], iteration_bounds = array<i64: 1>, scalar_prefetch = 0 : i64, scratch_operands = 0 : i64, tpu.core_type = #tpu.core_type<tc>, window_params = [{transform_indices = @transform_0, window_bounds = array<i64: 1, 128>}, {pipeline_mode = #tpu.pipeline_mode<synchronous>, transform_indices = @transform_1, window_bounds = array<i64: 16, 1>}, {pipeline_mode = #tpu.pipeline_mode<synchronous>, transform_indices = @transform_2, window_bounds = array<i64: 16, 1>}, {pipeline_mode = #tpu.pipeline_mode<synchronous>, transform_indices = @transform_3, window_bounds = array<i64: 16, 16>}, {pipeline_mode = #tpu.pipeline_mode<synchronous>, transform_indices = @transform_4, window_bounds = array<i64: 16, 1>}, {pipeline_mode = #tpu.pipeline_mode<synchronous>, transform_indices = @transform_5, window_bounds = array<i64: 4, 16>}, {pipeline_mode = #tpu.pipeline_mode<synchronous>, transform_indices = @transform_6, window_bounds = array<i64: 4, 1>}, {transform_indices = @transform_7, window_bounds = array<i64: 4, 128>}]} {
    %c0 = arith.constant 0 : index
    %c0_0 = arith.constant 0 : index
    %0 = vector.load %arg1[%c0, %c0_0] : memref<1x128xf32, #tpu.memory_space<vmem>>, vector<1x128xf32>
    %c0_1 = arith.constant 0 : index
    %c0_2 = arith.constant 0 : index
    %1 = vector.load %arg2[%c0_1, %c0_2] : memref<16x1xf32, #tpu.memory_space<vmem>>, vector<16x1xf32>
    %2 = vector.broadcast %1 : vector<16x1xf32> to vector<16x128xf32>
    %3 = vector.broadcast %0 : vector<1x128xf32> to vector<16x128xf32>
    %4 = arith.mulf %2, %3 : vector<16x128xf32>
    %c0_3 = arith.constant 0 : index
    %c0_4 = arith.constant 0 : index
    %5 = vector.load %arg3[%c0_3, %c0_4] : memref<16x1xf32, #tpu.memory_space<vmem>>, vector<16x1xf32>
    %6 = vector.broadcast %5 : vector<16x1xf32> to vector<16x128xf32>
    %7 = arith.addf %4, %6 : vector<16x128xf32>
    %cst = arith.constant 5.000000e-01 : f32
    %8 = vector.broadcast %cst : f32 to vector<16x128xf32>
    %9 = arith.mulf %8, %7 : vector<16x128xf32>
    %cst_5 = arith.constant 0.707106769 : f32
    %10 = vector.broadcast %cst_5 : f32 to vector<16x128xf32>
    %11 = arith.mulf %7, %10 : vector<16x128xf32>
    %12 = math.absf %11 : vector<16x128xf32>
    %cst_6 = arith.constant 0.327591091 : f32
    %13 = vector.broadcast %cst_6 : f32 to vector<16x128xf32>
    %14 = arith.mulf %13, %12 : vector<16x128xf32>
    %cst_7 = arith.constant 1.000000e+00 : f32
    %15 = vector.broadcast %cst_7 : f32 to vector<16x128xf32>
    %16 = arith.addf %15, %14 : vector<16x128xf32>
    %17 = tpu.reciprocal %16 {approx = true} : vector<16x128xf32> -> vector<16x128xf32>
    %18 = arith.mulf %16, %17 : vector<16x128xf32>
    %cst_8 = arith.constant 2.000000e+00 : f32
    %19 = vector.broadcast %cst_8 : f32 to vector<16x128xf32>
    %20 = arith.subf %19, %18 : vector<16x128xf32>
    %21 = arith.mulf %17, %20 : vector<16x128xf32>
    %cst_9 = arith.constant 1.06140542 : f32
    %22 = vector.broadcast %cst_9 : f32 to vector<16x128xf32>
    %23 = arith.mulf %21, %22 : vector<16x128xf32>
    %cst_10 = arith.constant -1.45315206 : f32
    %24 = vector.broadcast %cst_10 : f32 to vector<16x128xf32>
    %25 = arith.addf %24, %23 : vector<16x128xf32>
    %26 = arith.mulf %21, %25 : vector<16x128xf32>
    %cst_11 = arith.constant 1.42141378 : f32
    %27 = vector.broadcast %cst_11 : f32 to vector<16x128xf32>
    %28 = arith.addf %27, %26 : vector<16x128xf32>
    %29 = arith.mulf %21, %28 : vector<16x128xf32>
    %cst_12 = arith.constant -0.284496725 : f32
    %30 = vector.broadcast %cst_12 : f32 to vector<16x128xf32>
    %31 = arith.addf %30, %29 : vector<16x128xf32>
    %32 = arith.mulf %21, %31 : vector<16x128xf32>
    %cst_13 = arith.constant 0.254829586 : f32
    %33 = vector.broadcast %cst_13 : f32 to vector<16x128xf32>
    %34 = arith.addf %33, %32 : vector<16x128xf32>
    %35 = arith.mulf %21, %34 : vector<16x128xf32>
    %36 = arith.mulf %12, %12 : vector<16x128xf32>
    %cst_14 = arith.constant 0.000000e+00 : f32
    %37 = vector.broadcast %cst_14 : f32 to vector<16x128xf32>
    %38 = arith.subf %37, %36 : vector<16x128xf32>
    %39 = math.exp %38 : vector<16x128xf32>
    %40 = arith.mulf %35, %39 : vector<16x128xf32>
    %cst_15 = arith.constant 1.000000e+00 : f32
    %41 = vector.broadcast %cst_15 : f32 to vector<16x128xf32>
    %42 = arith.subf %41, %40 : vector<16x128xf32>
    %cst_16 = arith.constant 0.000000e+00 : f32
    %43 = vector.broadcast %cst_16 : f32 to vector<16x128xf32>
    %44 = arith.cmpf oge, %11, %43 : vector<16x128xf32>
    %cst_17 = arith.constant 0.000000e+00 : f32
    %45 = vector.broadcast %cst_17 : f32 to vector<16x128xf32>
    %46 = arith.subf %45, %42 : vector<16x128xf32>
    %47 = arith.select %44, %42, %46 : vector<16x128xi1>, vector<16x128xf32>
    %cst_18 = arith.constant 1.000000e+00 : f32
    %48 = vector.broadcast %cst_18 : f32 to vector<16x128xf32>
    %49 = arith.addf %48, %47 : vector<16x128xf32>
    %50 = arith.mulf %9, %49 : vector<16x128xf32>
    %c0_19 = arith.constant 0 : index
    %c0_20 = arith.constant 0 : index
    %51 = vector.load %arg4[%c0_19, %c0_20] : memref<16x16xf32, #tpu.memory_space<vmem>>, vector<16x16xf32>
    %cst_21 = arith.constant dense<0.000000e+00> : vector<16x128xf32>
    %52 = tpu.matmul %51, %50, %cst_21 {dimension_numbers = #tpu.dot_dimension_numbers<[1], [0], [0], [1], [0, 0, 1, 1], [], []>} : vector<16x16xf32>, vector<16x128xf32>, vector<16x128xf32> -> vector<16x128xf32>
    %c0_22 = arith.constant 0 : index
    %c0_23 = arith.constant 0 : index
    %53 = vector.load %arg5[%c0_22, %c0_23] : memref<16x1xf32, #tpu.memory_space<vmem>>, vector<16x1xf32>
    %54 = vector.broadcast %53 : vector<16x1xf32> to vector<16x128xf32>
    %55 = arith.addf %52, %54 : vector<16x128xf32>
    %cst_24 = arith.constant 5.000000e-01 : f32
    %56 = vector.broadcast %cst_24 : f32 to vector<16x128xf32>
    %57 = arith.mulf %56, %55 : vector<16x128xf32>
    %cst_25 = arith.constant 0.707106769 : f32
    %58 = vector.broadcast %cst_25 : f32 to vector<16x128xf32>
    %59 = arith.mulf %55, %58 : vector<16x128xf32>
    %60 = math.absf %59 : vector<16x128xf32>
    %cst_26 = arith.constant 0.327591091 : f32
    %61 = vector.broadcast %cst_26 : f32 to vector<16x128xf32>
    %62 = arith.mulf %61, %60 : vector<16x128xf32>
    %cst_27 = arith.constant 1.000000e+00 : f32
    %63 = vector.broadcast %cst_27 : f32 to vector<16x128xf32>
    %64 = arith.addf %63, %62 : vector<16x128xf32>
    %65 = tpu.reciprocal %64 {approx = true} : vector<16x128xf32> -> vector<16x128xf32>
    %66 = arith.mulf %64, %65 : vector<16x128xf32>
    %cst_28 = arith.constant 2.000000e+00 : f32
    %67 = vector.broadcast %cst_28 : f32 to vector<16x128xf32>
    %68 = arith.subf %67, %66 : vector<16x128xf32>
    %69 = arith.mulf %65, %68 : vector<16x128xf32>
    %cst_29 = arith.constant 1.06140542 : f32
    %70 = vector.broadcast %cst_29 : f32 to vector<16x128xf32>
    %71 = arith.mulf %69, %70 : vector<16x128xf32>
    %cst_30 = arith.constant -1.45315206 : f32
    %72 = vector.broadcast %cst_30 : f32 to vector<16x128xf32>
    %73 = arith.addf %72, %71 : vector<16x128xf32>
    %74 = arith.mulf %69, %73 : vector<16x128xf32>
    %cst_31 = arith.constant 1.42141378 : f32
    %75 = vector.broadcast %cst_31 : f32 to vector<16x128xf32>
    %76 = arith.addf %75, %74 : vector<16x128xf32>
    %77 = arith.mulf %69, %76 : vector<16x128xf32>
    %cst_32 = arith.constant -0.284496725 : f32
    %78 = vector.broadcast %cst_32 : f32 to vector<16x128xf32>
    %79 = arith.addf %78, %77 : vector<16x128xf32>
    %80 = arith.mulf %69, %79 : vector<16x128xf32>
    %cst_33 = arith.constant 0.254829586 : f32
    %81 = vector.broadcast %cst_33 : f32 to vector<16x128xf32>
    %82 = arith.addf %81, %80 : vector<16x128xf32>
    %83 = arith.mulf %69, %82 : vector<16x128xf32>
    %84 = arith.mulf %60, %60 : vector<16x128xf32>
    %cst_34 = arith.constant 0.000000e+00 : f32
    %85 = vector.broadcast %cst_34 : f32 to vector<16x128xf32>
    %86 = arith.subf %85, %84 : vector<16x128xf32>
    %87 = math.exp %86 : vector<16x128xf32>
    %88 = arith.mulf %83, %87 : vector<16x128xf32>
    %cst_35 = arith.constant 1.000000e+00 : f32
    %89 = vector.broadcast %cst_35 : f32 to vector<16x128xf32>
    %90 = arith.subf %89, %88 : vector<16x128xf32>
    %cst_36 = arith.constant 0.000000e+00 : f32
    %91 = vector.broadcast %cst_36 : f32 to vector<16x128xf32>
    %92 = arith.cmpf oge, %59, %91 : vector<16x128xf32>
    %cst_37 = arith.constant 0.000000e+00 : f32
    %93 = vector.broadcast %cst_37 : f32 to vector<16x128xf32>
    %94 = arith.subf %93, %90 : vector<16x128xf32>
    %95 = arith.select %92, %90, %94 : vector<16x128xi1>, vector<16x128xf32>
    %cst_38 = arith.constant 1.000000e+00 : f32
    %96 = vector.broadcast %cst_38 : f32 to vector<16x128xf32>
    %97 = arith.addf %96, %95 : vector<16x128xf32>
    %98 = arith.mulf %57, %97 : vector<16x128xf32>
    %c0_39 = arith.constant 0 : index
    %c0_40 = arith.constant 0 : index
    %99 = vector.load %arg6[%c0_39, %c0_40] : memref<4x16xf32, #tpu.memory_space<vmem>>, vector<4x16xf32>
    %cst_41 = arith.constant dense<0.000000e+00> : vector<4x128xf32>
    %100 = tpu.matmul %99, %98, %cst_41 {dimension_numbers = #tpu.dot_dimension_numbers<[1], [0], [0], [1], [0, 0, 1, 1], [], []>} : vector<4x16xf32>, vector<16x128xf32>, vector<4x128xf32> -> vector<4x128xf32>
    %c0_42 = arith.constant 0 : index
    %c0_43 = arith.constant 0 : index
    %101 = vector.load %arg7[%c0_42, %c0_43] : memref<4x1xf32, #tpu.memory_space<vmem>>, vector<4x1xf32>
    %102 = vector.broadcast %101 : vector<4x1xf32> to vector<4x128xf32>
    %103 = arith.addf %100, %102 : vector<4x128xf32>
    %c0_44 = arith.constant 0 : index
    %c0_45 = arith.constant 0 : index
    %104 = vector.load %arg8[%c0_44, %c0_45] : memref<4x128xf32, #tpu.memory_space<vmem>>, vector<4x128xf32>
    tpu.vector_store %arg8[%c0_44, %c0_45], %103 {strides = array<i32>} : memref<4x128xf32, #tpu.memory_space<vmem>>, vector<4x128xf32>,
    return
  }
  func.func @transform_0(%arg0: i32) -> (i32, i32) {
    %c0_i32 = arith.constant 0 : i32
    %c0_i32_0 = arith.constant 0 : i32
    return %c0_i32, %arg0 : i32, i32
  }
  func.func @transform_1(%arg0: i32) -> (i32, i32) {
    %c0_i32 = arith.constant 0 : i32
    %c0_i32_0 = arith.constant 0 : i32
    %c0_i32_1 = arith.constant 0 : i32
    return %c0_i32, %c0_i32_0 : i32, i32
  }
  func.func @transform_2(%arg0: i32) -> (i32, i32) {
    %c0_i32 = arith.constant 0 : i32
    %c0_i32_0 = arith.constant 0 : i32
    %c0_i32_1 = arith.constant 0 : i32
    return %c0_i32, %c0_i32_0 : i32, i32
  }
  func.func @transform_3(%arg0: i32) -> (i32, i32) {
    %c0_i32 = arith.constant 0 : i32
    %c0_i32_0 = arith.constant 0 : i32
    %c0_i32_1 = arith.constant 0 : i32
    return %c0_i32, %c0_i32_0 : i32, i32
  }
  func.func @transform_4(%arg0: i32) -> (i32, i32) {
    %c0_i32 = arith.constant 0 : i32
    %c0_i32_0 = arith.constant 0 : i32
    %c0_i32_1 = arith.constant 0 : i32
    return %c0_i32, %c0_i32_0 : i32, i32
  }
  func.func @transform_5(%arg0: i32) -> (i32, i32) {
    %c0_i32 = arith.constant 0 : i32
    %c0_i32_0 = arith.constant 0 : i32
    %c0_i32_1 = arith.constant 0 : i32
    return %c0_i32, %c0_i32_0 : i32, i32
  }
  func.func @transform_6(%arg0: i32) -> (i32, i32) {
    %c0_i32 = arith.constant 0 : i32
    %c0_i32_0 = arith.constant 0 : i32
    %c0_i32_1 = arith.constant 0 : i32
    return %c0_i32, %c0_i32_0 : i32, i32
  }
  func.func @transform_7(%arg0: i32) -> (i32, i32) {
    %c0_i32 = arith.constant 0 : i32
    %c0_i32_0 = arith.constant 0 : i32
    return %c0_i32, %arg0 : i32, i32
  }
}

</mosaic_0001>

<llo_original>
// kernel: seasonal_pattern_forward.1
$region0: #{seasonal_pattern_forward.1}
  #allocation0 [shape = 'u32[]', space=smem, size = 0x4, offset = 0x4, fixed_abs, tag = 'smem constant byte address 0x4 - core index']
  #allocation1 [shape = 'u32[72,128]{1,0:T(1,128)}', space=vmem, size = 0x9000, scoped, tag = 'internal scratch']
  %s0 = inlined_call_operand.vmem [shape: f32[1,8], index: 0, kind: input, shape index: {}]
  %s1 = inlined_call_operand.vmem [shape: f32[16,1], index: 1, kind: input, shape index: {}]
  %s2 = inlined_call_operand.vmem [shape: f32[16,1], index: 2, kind: input, shape index: {}]
  %s3 = inlined_call_operand.vmem [shape: f32[16,16], index: 3, kind: input, shape index: {}]
  %s4 = inlined_call_operand.vmem [shape: f32[16,1], index: 4, kind: input, shape index: {}]
  %s5 = inlined_call_operand.vmem [shape: f32[4,16], index: 5, kind: input, shape index: {}]
  %s6 = inlined_call_operand.vmem [shape: f32[4,1], index: 6, kind: input, shape index: {}]
  %s7 = inlined_call_operand.hbm [shape: f32[4,8], index: 7, kind: output, shape index: {}]
  %s8 = sld [smem:[#allocation0]]
  $region38: #{seasonal_pattern_forward.1} parent=0
    _
  %s10 = ssub.s32 1, %s8
  %s11 = scalar_select 0, %s10, %s8
  $region1: #{seasonal_pattern_forward.1} parent=0
    #allocation2 [shape = 'u8[2048]{0}', space=vmem, size = 0x800, scoped, tag = 'output window, operand 0, single buffered']
    #allocation3 [shape = 's32[1]{0}', space=sflag, size = 0x4, scoped, tag = 'scoped memory for seasonal_pattern_forward.1']
    %12 = vsyncpa [#allocation3], 0
    // Predicated region
    $region2: #{seasonal_pattern_forward.1} parent=1 // pred_check
      _
    $region3: #{seasonal_pattern_forward.1} parent=1 // pred_check_branch
      %14 = sbr.rel (0) target = $region5
    $region4: #{seasonal_pattern_forward.1} parent=1 // pred_region
      _
    $region5: #{seasonal_pattern_forward.1} parent=1 // pred_fallthru
      _
    // Predicated region
    $region6: #{seasonal_pattern_forward.1} parent=1 // pred_check
      _
    $region7: #{seasonal_pattern_forward.1} parent=1 // pred_check_branch
      %16 = sbr.rel (0) target = $region9
    $region8: #{seasonal_pattern_forward.1} parent=1 // pred_region
      _
    $region9: #{seasonal_pattern_forward.1} parent=1 // pred_fallthru
      _
    // Predicated region
    $region10: #{seasonal_pattern_forward.1} parent=1 // pred_check
      _
    $region11: #{seasonal_pattern_forward.1} parent=1 // pred_check_branch
      %18 = sbr.rel (0) target = $region13
    $region12: #{seasonal_pattern_forward.1} parent=1 // pred_region
      _
    $region13: #{seasonal_pattern_forward.1} parent=1 // pred_fallthru
      _
    // Predicated region
    $region14: #{seasonal_pattern_forward.1} parent=1 // pred_check
      _
    $region15: #{seasonal_pattern_forward.1} parent=1 // pred_check_branch
      %20 = sbr.rel (0) target = $region17
    $region16: #{seasonal_pattern_forward.1} parent=1 // pred_region
      _
    $region17: #{seasonal_pattern_forward.1} parent=1 // pred_fallthru
      _
    // Predicated region
    $region18: #{seasonal_pattern_forward.1} parent=1 // pred_check
      _
    $region19: #{seasonal_pattern_forward.1} parent=1 // pred_check_branch
      %22 = sbr.rel (0) target = $region21
    $region20: #{seasonal_pattern_forward.1} parent=1 // pred_region
      _
    $region21: #{seasonal_pattern_forward.1} parent=1 // pred_fallthru
      _
    // Predicated region
    $region22: #{seasonal_pattern_forward.1} parent=1 // pred_check
      _
    $region23: #{seasonal_pattern_forward.1} parent=1 // pred_check_branch
      %24 = sbr.rel (0) target = $region25
    $region24: #{seasonal_pattern_forward.1} parent=1 // pred_region
      _
    $region25: #{seasonal_pattern_forward.1} parent=1 // pred_fallthru
      _
    // Predicated region
    $region26: #{seasonal_pattern_forward.1} parent=1 // pred_check
      _
    $region27: #{seasonal_pattern_forward.1} parent=1 // pred_check_branch
      %26 = sbr.rel (0) target = $region29
    $region28: #{seasonal_pattern_forward.1} parent=1 // pred_region
      _
    $region29: #{seasonal_pattern_forward.1} parent=1 // pred_fallthru
      _
    %v27 = vld [vmem:[%s0] sm:$0x1]
    %v28 = vld [vmem:[%s1] sm:$0xff]
    %v29 = vld [vmem:[%s1 + $0x8] sm:$0xff]
    %31 = vset.pattern.permute.xlu0 0
    %32 = vperm.xlu0 %31, %v28
    %v33 = vpop.permute.xlu0 %32
    %36 = vset.pattern.permute.xlu0 0
    %37 = vperm.xlu0 %36, %v29
    %v38 = vpop.permute.xlu0 %37
    %v41 = vperm.slane %v27, 0
    %v43 = vmul.f32 %v33, %v41
    %v44 = vmul.f32 %v38, %v41
    %v45 = vld [vmem:[%s2] sm:$0xff]
    %v46 = vld [vmem:[%s2 + $0x8] sm:$0xff]
    %48 = vset.pattern.permute.xlu0 0
    %49 = vperm.xlu0 %48, %v45
    %v50 = vpop.permute.xlu0 %49
    %53 = vset.pattern.permute.xlu0 0
    %54 = vperm.xlu0 %53, %v46
    %v55 = vpop.permute.xlu0 %54
    %v57 = vadd.f32 %v43, %v50
    %v58 = vadd.f32 %v44, %v55
    %v59 = vmul.f32 %v57, 0.5
    %v60 = vmul.f32 %v58, 0.5
    %v61 = vmul.f32 %v57, 0.70710677
    %v62 = vmul.f32 %v58, 0.70710677
    %v63 = vand.u32 2147483647, %v61
    %v64 = vand.u32 2147483647, %v62
    %v65 = vmul.f32 %v63, 0.3275911
    %v66 = vmul.f32 %v64, 0.3275911
    %v67 = vadd.f32 %v65, 1.0
    %v68 = vadd.f32 %v66, 1.0
    %v69 = vrcp.pop %v67
    %v70 = vrcp.pop %v68
    %v71 = vmul.f32 %v67, %v69
    %v72 = vmul.f32 %v68, %v70
    %v73 = vsub.f32 2.0, %v71
    %v74 = vsub.f32 2.0, %v72
    %v75 = vmul.f32 %v69, %v73
    %v76 = vmul.f32 %v70, %v74
    %v77 = vmul.f32 %v75, 1.0614054
    %v78 = vmul.f32 %v76, 1.0614054
    %v79 = vadd.f32 %v77, -1.4531521
    %v80 = vadd.f32 %v78, -1.4531521
    %v81 = vmul.f32 %v75, %v79
    %v82 = vmul.f32 %v76, %v80
    %v83 = vadd.f32 %v81, 1.4214138
    %v84 = vadd.f32 %v82, 1.4214138
    %v85 = vmul.f32 %v75, %v83
    %v86 = vmul.f32 %v76, %v84
    %v87 = vadd.f32 %v85, -0.28449672
    %v88 = vadd.f32 %v86, -0.28449672
    %v89 = vmul.f32 %v75, %v87
    %v90 = vmul.f32 %v76, %v88
    %v91 = vadd.f32 %v89, 0.2548296
    %v92 = vadd.f32 %v90, 0.2548296
    %v93 = vmul.f32 %v75, %v91
    %v94 = vmul.f32 %v76, %v92
    %v95 = vmul.f32 %v63, %v63
    %v96 = vmul.f32 %v64, %v64
    %v97 = vsub.f32 0.0, %v95
    %v98 = vsub.f32 0.0, %v96
    %v99 = vmul.f32 %v97, 1.442695
    %v100 = vpow.pop %v99
    %v101 = vmul.f32 %v98, 1.442695
    %v102 = vpow.pop %v101
    %v103 = vmul.f32 %v93, %v100
    %v104 = vmul.f32 %v94, %v102
    %v105 = vsub.f32 1.0, %v103
    %v106 = vsub.f32 1.0, %v104
    %vm107 = vcmp.ge.f32.partialorder %v61, 0.0
    %vm108 = vcmp.ge.f32.partialorder %v62, 0.0
    %v109 = vsub.f32 0.0, %v105
    %v110 = vsub.f32 0.0, %v106
    %v111 = vsel %vm107, %v105, %v109
    %v112 = vsel %vm108, %v106, %v110
    %v113 = vadd.f32 %v111, 1.0
    %v114 = vadd.f32 %v112, 1.0
    %v115 = vmul.f32 %v59, %v113
    %v116 = vmul.f32 %v60, %v114
    %v117 = vld [vmem:[%s3] sm:$0xff]
    %v118 = vld [vmem:[%s3 + $0x8] sm:$0xff]
    %v119 = vld [vmem:[%s4] sm:$0xff]
    %v120 = vld [vmem:[%s4 + $0x8] sm:$0xff]
    %122 = vset.pattern.permute.xlu0 0
    %123 = vperm.xlu0 %122, %v119
    %v124 = vpop.permute.xlu0 %123
    %127 = vset.pattern.permute.xlu0 0
    %128 = vperm.xlu0 %127, %v120
    %v129 = vpop.permute.xlu0 %128
    %vm131 = vcmask 130048
    %v133 = vsel %vm131, %v117, 0
    %v136 = vsel %vm131, %v118, 0
    %138 = vmatpush.msra.mxu0 0.0
    %139 = vmatpush.msra.mxu0 0.0
    %140 = vmatpush.msra.mxu0 0.0
    %141 = vmatpush.msra.mxu0 0.0
    %142 = vmatpush.msra.mxu0 0.0
    %143 = vmatpush.msra.mxu0 0.0
    %144 = vmatpush.msra.mxu0 0.0
    %145 = vmatpush.msra.mxu0 0.0
    %146 = vmatpush.msra.mxu0 0.0
    %147 = vmatpush.msra.mxu0 0.0
    %148 = vmatpush.msra.mxu0 0.0
    %149 = vmatpush.msra.mxu0 0.0
    %150 = vmatpush.msra.mxu0 0.0
    %151 = vmatpush.msra.mxu0 0.0
    %152 = vmatpush.msra.mxu0 %v116
    %153 = vmatpush.msra.mxu0 %v115
    %154 = vmatmul.f32.gmra.mxu0 %v133
    %v155 = vpop.f32.mrf.mxu0
    %v156 = vadd.f32 %v124, %v155
    %157 = vmatmul.f32.gmra.mxu0 %v136
    %v158 = vpop.f32.mrf.mxu0
    %v159 = vadd.f32 %v129, %v158
    %160 = vdwg.mxu0
    %v161 = vmul.f32 %v156, 0.5
    %v162 = vmul.f32 %v159, 0.5
    %v163 = vmul.f32 %v156, 0.70710677
    %v164 = vmul.f32 %v159, 0.70710677
    %v165 = vand.u32 2147483647, %v163
    %v166 = vand.u32 2147483647, %v164
    %v167 = vmul.f32 %v165, 0.3275911
    %v168 = vmul.f32 %v166, 0.3275911
    %v169 = vadd.f32 %v167, 1.0
    %v170 = vadd.f32 %v168, 1.0
    %v171 = vrcp.pop %v169
    %v172 = vrcp.pop %v170
    %v173 = vmul.f32 %v169, %v171
    %v174 = vmul.f32 %v170, %v172
    %v175 = vsub.f32 2.0, %v173
    %v176 = vsub.f32 2.0, %v174
    %v177 = vmul.f32 %v171, %v175
    %v178 = vmul.f32 %v172, %v176
    %v179 = vmul.f32 %v177, 1.0614054
    %v180 = vmul.f32 %v178, 1.0614054
    %v181 = vadd.f32 %v179, -1.4531521
    %v182 = vadd.f32 %v180, -1.4531521
    %v183 = vmul.f32 %v177, %v181
    %v184 = vmul.f32 %v178, %v182
    %v185 = vadd.f32 %v183, 1.4214138
    %v186 = vadd.f32 %v184, 1.4214138
    %v187 = vmul.f32 %v177, %v185
    %v188 = vmul.f32 %v178, %v186
    %v189 = vadd.f32 %v187, -0.28449672
    %v190 = vadd.f32 %v188, -0.28449672
    %v191 = vmul.f32 %v177, %v189
    %v192 = vmul.f32 %v178, %v190
    %v193 = vadd.f32 %v191, 0.2548296
    %v194 = vadd.f32 %v192, 0.2548296
    %v195 = vmul.f32 %v177, %v193
    %v196 = vmul.f32 %v178, %v194
    %v197 = vmul.f32 %v165, %v165
    %v198 = vmul.f32 %v166, %v166
    %v199 = vsub.f32 0.0, %v197
    %v200 = vsub.f32 0.0, %v198
    %v201 = vmul.f32 %v199, 1.442695
    %v202 = vpow.pop %v201
    %v203 = vmul.f32 %v200, 1.442695
    %v204 = vpow.pop %v203
    %v205 = vmul.f32 %v195, %v202
    %v206 = vmul.f32 %v196, %v204
    %v207 = vsub.f32 1.0, %v205
    %v208 = vsub.f32 1.0, %v206
    %vm209 = vcmp.ge.f32.partialorder %v163, 0.0
    %vm210 = vcmp.ge.f32.partialorder %v164, 0.0
    %v211 = vsub.f32 0.0, %v207
    %v212 = vsub.f32 0.0, %v208
    %v213 = vsel %vm209, %v207, %v211
    %v214 = vsel %vm210, %v208, %v212
    %v215 = vadd.f32 %v213, 1.0
    %v216 = vadd.f32 %v214, 1.0
    %v217 = vmul.f32 %v161, %v215
    %v218 = vmul.f32 %v162, %v216
    %v219 = vld [vmem:[%s5] sm:$0xf]
    %v220 = vld [vmem:[%s6] sm:$0xf]
    %222 = vset.pattern.permute.xlu0 0
    %223 = vperm.xlu0 %222, %v220
    %v224 = vpop.permute.xlu0 %223
    %v227 = vsel %vm131, %v219, 0
    %229 = vmatpush.msra.mxu0 0.0
    %230 = vmatpush.msra.mxu0 0.0
    %231 = vmatpush.msra.mxu0 0.0
    %232 = vmatpush.msra.mxu0 0.0
    %233 = vmatpush.msra.mxu0 0.0
    %234 = vmatpush.msra.mxu0 0.0
    %235 = vmatpush.msra.mxu0 0.0
    %236 = vmatpush.msra.mxu0 0.0
    %237 = vmatpush.msra.mxu0 0.0
    %238 = vmatpush.msra.mxu0 0.0
    %239 = vmatpush.msra.mxu0 0.0
    %240 = vmatpush.msra.mxu0 0.0
    %241 = vmatpush.msra.mxu0 0.0
    %242 = vmatpush.msra.mxu0 0.0
    %243 = vmatpush.msra.mxu0 %v218
    %244 = vmatpush.msra.mxu0 %v217
    %245 = vmatmul.f32.gmra.mxu0 %v227
    %v246 = vpop.f32.mrf.mxu0
    %v247 = vadd.f32 %v224, %v246
    %248 = vdwg.mxu0
    %249 = vst [vmem:[#allocation2] sm:$0xf] %v247
    // Predicated region
    $region30: #{seasonal_pattern_forward.1} parent=1 // pred_check
      _
    $region31: #{seasonal_pattern_forward.1} parent=1 // pred_check_branch
      %251 = sbr.rel (0) target = $region33
    $region32: #{seasonal_pattern_forward.1} parent=1 // pred_region
      %253 = vsyncadd [#allocation3], 0
      %s255 = sshll.u32 [#allocation2], 4
      %s256 = int_to_ptr.vmem [resolvable:$true] %s255
      %s257 = sshll.u32 %s7, 4
      %s258 = int_to_ptr.hbm [resolvable:$true] %s257
      %260 = dma.vmem_to_hbm [thread:$0]  %s256, 64, %s258, [#allocation3]
    $region33: #{seasonal_pattern_forward.1} parent=1 // pred_fallthru
      _
    // Predicated region
    $region34: #{seasonal_pattern_forward.1} parent=1 // pred_check
      _
    $region35: #{seasonal_pattern_forward.1} parent=1 // pred_check_branch
      %262 = sbr.rel (0) target = $region37
    $region36: #{seasonal_pattern_forward.1} parent=1 // pred_region
      %264 = dma.done [#allocation3], 64
    $region37: #{seasonal_pattern_forward.1} parent=1 // pred_fallthru
      _
    %265 = vsyncpa [#allocation3], 1

</llo_original>
